<compile_context>
chip_gen: v5e
topology: v5e:2x2
jax: 0.10.0
libtpu: 0.0.40
codegen_flags: <defaults>
</compile_context>

<pallas_src>
import functools

import jax
import jax.numpy as jnp
from jax.experimental import pallas as pl
from jax.experimental.pallas import tpu as pltpu

_NEG_LARGE = -1e30  # effectively -inf for padded class lanes, but finite (no NaN risk)


def logreg_kernel(x_ref, w_ref, b_ref, o_ref):
    # Linear: logits = x @ W_t + b, accumulated in f32 on the MXU.
    logits = jnp.dot(x_ref[...], w_ref[...], preferred_element_type=jnp.float32)
    logits = logits + b_ref[...]
    # Numerically stable LogSoftmax along the class axis (dim=1).
    m = jnp.max(logits, axis=-1, keepdims=True)
    shifted = logits - m
    lse = jnp.log(jnp.sum(jnp.exp(shifted), axis=-1, keepdims=True))
    o_ref[...] = (shifted - lse).astype(o_ref.dtype)


def _round_up(n, m):
    return ((n + m - 1) // m) * m


@functools.partial(jax.jit, static_argnames=("tile_m", "use_bf16"))
def logreg_forward(x, weight, bias, *, tile_m=512, use_bf16=True):
    """log_softmax(x @ weight.T + bias, axis=1).

    x: (B, D_in) f32, weight: (D_out, D_in) (PyTorch nn.Linear layout),
    bias: (D_out,). Returns (B, D_out) float32.
    """
    B, D_in = x.shape
    D_out = weight.shape[0]

    # Lane-dense output: pad class dim to a multiple of 128. Padded logits are
    # forced to ~-inf via the bias so they contribute nothing to max / exp-sum.
    d_out_p = _round_up(max(D_out, 128), 128)

    # Batch tiling: tile_m rows per grid step (kept a multiple of 8 sublanes).
    tile_m = min(tile_m, _round_up(B, 8))
    b_p = _round_up(B, tile_m)

    mm_dtype = jnp.bfloat16 if use_bf16 else jnp.float32
    x_p = jnp.pad(x, ((0, b_p - B), (0, 0))).astype(mm_dtype)
    w_t = jnp.pad(weight.T, ((0, 0), (0, d_out_p - D_out))).astype(mm_dtype)
    bias_p = jnp.pad(bias.astype(jnp.float32), (0, d_out_p - D_out),
                     constant_values=_NEG_LARGE).reshape(1, d_out_p)

    grid = (pl.cdiv(b_p, tile_m),)
    out = pl.pallas_call(
        logreg_kernel,
        out_shape=jax.ShapeDtypeStruct((b_p, d_out_p), jnp.float32),
        grid=grid,
        in_specs=[
            pl.BlockSpec((tile_m, D_in), lambda i: (i, 0)),     # streamed batch tiles
            pl.BlockSpec((D_in, d_out_p), lambda i: (0, 0)),    # weight: VMEM-resident
            pl.BlockSpec((1, d_out_p), lambda i: (0, 0)),       # bias:   VMEM-resident
        ],
        out_specs=pl.BlockSpec((tile_m, d_out_p), lambda i: (i, 0)),
        compiler_params=pltpu.CompilerParams(
            dimension_semantics=("parallel",)),                 # 2 TCs on v7x
    )(x_p, w_t, bias_p)

    return out[:B, :D_out]


if __name__ == "__main__":
    # Small shapes consistent with LogReg(input_dim, output_dim).
    batch, input_dim, output_dim = 8, 32, 16

    key = jax.random.PRNGKey(0)
    kx, kw, kb = jax.random.split(key, 3)

    # Deterministic init mimicking nn.Linear default U(-1/sqrt(in), 1/sqrt(in)).
    bound = 1.0 / (input_dim ** 0.5)
    w = jax.random.uniform(kw, (output_dim, input_dim), jnp.float32, -bound, bound)
    b = jax.random.uniform(kb, (output_dim,), jnp.float32, -bound, bound)
    x = jax.random.normal(kx, (batch, input_dim), jnp.float32)

    out = jax.block_until_ready(logreg_forward(x, w, b))
    assert out.shape == (batch, output_dim)

    # Reference: same bf16 rounding of matmul operands, f32 accumulation / softmax.
    xr = x.astype(jnp.bfloat16).astype(jnp.float32)
    wr = w.astype(jnp.bfloat16).astype(jnp.float32)
    ref = jax.nn.log_softmax(xr @ wr.T + b[None, :], axis=1)
    assert jnp.allclose(out, ref, atol=1e-3, rtol=1e-3), "mismatch vs reference"

    print("KERNEL_OK")
</pallas_src>

<mosaic_0001>
module attributes {stable_mosaic.version = 11 : i64} {
  func.func @logreg_kernel(%arg0: i32, %arg1: memref<8x32xbf16, #tpu.memory_space<vmem>>, %arg2: memref<32x128xbf16, #tpu.memory_space<vmem>>, %arg3: memref<1x128xf32, #tpu.memory_space<vmem>>, %arg4: memref<8x128xf32, #tpu.memory_space<vmem>>) attributes {dimension_semantics = [#tpu.dimension_semantics<parallel>], iteration_bounds = array<i64: 1>, scalar_prefetch = 0 : i64, scratch_operands = 0 : i64, tpu.core_type = #tpu.core_type<tc>, window_params = [{transform_indices = @transform_0, window_bounds = array<i64: 8, 32>}, {pipeline_mode = #tpu.pipeline_mode<synchronous>, transform_indices = @transform_1, window_bounds = array<i64: 32, 128>}, {pipeline_mode = #tpu.pipeline_mode<synchronous>, transform_indices = @transform_2, window_bounds = array<i64: 1, 128>}, {transform_indices = @transform_3, window_bounds = array<i64: 8, 128>}]} {
    %c0 = arith.constant 0 : index
    %c0_0 = arith.constant 0 : index
    %0 = vector.load %arg1[%c0, %c0_0] : memref<8x32xbf16, #tpu.memory_space<vmem>>, vector<8x32xbf16>
    %c0_1 = arith.constant 0 : index
    %c0_2 = arith.constant 0 : index
    %1 = vector.load %arg2[%c0_1, %c0_2] : memref<32x128xbf16, #tpu.memory_space<vmem>>, vector<32x128xbf16>
    %cst = arith.constant dense<0.000000e+00> : vector<8x128xf32>
    %2 = tpu.matmul %0, %1, %cst {dimension_numbers = #tpu.dot_dimension_numbers<[1], [0], [0], [1], [0, 0, 1, 1], [], []>} : vector<8x32xbf16>, vector<32x128xbf16>, vector<8x128xf32> -> vector<8x128xf32>
    %c0_3 = arith.constant 0 : index
    %c0_4 = arith.constant 0 : index
    %3 = vector.load %arg3[%c0_3, %c0_4] : memref<1x128xf32, #tpu.memory_space<vmem>>, vector<1x128xf32>
    %4 = vector.broadcast %3 : vector<1x128xf32> to vector<8x128xf32>
    %5 = arith.addf %2, %4 : vector<8x128xf32>
    %cst_5 = arith.constant dense<0xFF800000> : vector<8xf32>
    %6 = vector.multi_reduction <maximumf>, %5, %cst_5 [1] : vector<8x128xf32> to vector<8xf32>
    %7 = vector.shape_cast %6 : vector<8xf32> to vector<8x1xf32>
    %8 = vector.broadcast %7 : vector<8x1xf32> to vector<8x128xf32>
    %9 = arith.subf %5, %8 : vector<8x128xf32>
    %10 = math.exp %9 : vector<8x128xf32>
    %cst_6 = arith.constant dense<0.000000e+00> : vector<8xf32>
    %11 = vector.multi_reduction <add>, %10, %cst_6 [1] : vector<8x128xf32> to vector<8xf32>
    %12 = vector.shape_cast %11 : vector<8xf32> to vector<8x1xf32>
    %13 = math.log %12 : vector<8x1xf32>
    %14 = vector.broadcast %13 : vector<8x1xf32> to vector<8x128xf32>
    %15 = arith.subf %9, %14 : vector<8x128xf32>
    %c0_7 = arith.constant 0 : index
    %c0_8 = arith.constant 0 : index
    %16 = vector.load %arg4[%c0_7, %c0_8] : memref<8x128xf32, #tpu.memory_space<vmem>>, vector<8x128xf32>
    tpu.vector_store %arg4[%c0_7, %c0_8], %15 {strides = array<i32>} : memref<8x128xf32, #tpu.memory_space<vmem>>, vector<8x128xf32>,
    return
  }
  func.func @transform_0(%arg0: i32) -> (i32, i32) {
    %c0_i32 = arith.constant 0 : i32
    %c0_i32_0 = arith.constant 0 : i32
    return %arg0, %c0_i32 : i32, i32
  }
  func.func @transform_1(%arg0: i32) -> (i32, i32) {
    %c0_i32 = arith.constant 0 : i32
    %c0_i32_0 = arith.constant 0 : i32
    %c0_i32_1 = arith.constant 0 : i32
    return %c0_i32, %c0_i32_0 : i32, i32
  }
  func.func @transform_2(%arg0: i32) -> (i32, i32) {
    %c0_i32 = arith.constant 0 : i32
    %c0_i32_0 = arith.constant 0 : i32
    %c0_i32_1 = arith.constant 0 : i32
    return %c0_i32, %c0_i32_0 : i32, i32
  }
  func.func @transform_3(%arg0: i32) -> (i32, i32) {
    %c0_i32 = arith.constant 0 : i32
    %c0_i32_0 = arith.constant 0 : i32
    return %arg0, %c0_i32 : i32, i32
  }
}

</mosaic_0001>

<llo_original>
// kernel: logreg_forward.1
$region0: #{logreg_forward.1}
  #allocation0 [shape = 'u32[]', space=smem, size = 0x4, offset = 0x4, fixed_abs, tag = 'smem constant byte address 0x4 - core index']
  #allocation1 [shape = 'u32[72,128]{1,0:T(1,128)}', space=vmem, size = 0x9000, scoped, tag = 'internal scratch']
  %s0 = inlined_call_operand.vmem [shape: bf16[8,32], index: 0, kind: input, shape index: {}]
  %s1 = inlined_call_operand.vmem [shape: bf16[32,128], index: 1, kind: input, shape index: {}]
  %s2 = inlined_call_operand.vmem [shape: f32[1,128], index: 2, kind: input, shape index: {}]
  %s3 = inlined_call_operand.hbm [shape: f32[8,128], index: 3, kind: output, shape index: {}]
  %s4 = sld [smem:[#allocation0]]
  $region22: #{logreg_forward.1} parent=0
    _
  %s6 = ssub.s32 1, %s4
  %s7 = scalar_select 0, %s6, %s4
  $region1: #{logreg_forward.1} parent=0
    #allocation2 [shape = 'u8[4096]{0}', space=vmem, size = 0x1000, scoped, tag = 'output window, operand 0, single buffered']
    #allocation3 [shape = 's32[1]{0}', space=sflag, size = 0x4, scoped, tag = 'scoped memory for logreg_forward.1']
    %8 = vsyncpa [#allocation3], 0
    // Predicated region
    $region2: #{logreg_forward.1} parent=1 // pred_check
      _
    $region3: #{logreg_forward.1} parent=1 // pred_check_branch
      %10 = sbr.rel (0) target = $region5
    $region4: #{logreg_forward.1} parent=1 // pred_region
      _
    $region5: #{logreg_forward.1} parent=1 // pred_fallthru
      _
    // Predicated region
    $region6: #{logreg_forward.1} parent=1 // pred_check
      _
    $region7: #{logreg_forward.1} parent=1 // pred_check_branch
      %12 = sbr.rel (0) target = $region9
    $region8: #{logreg_forward.1} parent=1 // pred_region
      _
    $region9: #{logreg_forward.1} parent=1 // pred_fallthru
      _
    // Predicated region
    $region10: #{logreg_forward.1} parent=1 // pred_check
      _
    $region11: #{logreg_forward.1} parent=1 // pred_check_branch
      %14 = sbr.rel (0) target = $region13
    $region12: #{logreg_forward.1} parent=1 // pred_region
      _
    $region13: #{logreg_forward.1} parent=1 // pred_fallthru
      _
    %v16 = vld [vmem:[%s0] sm:$0xf]
    %v17 = vld [vmem:[%s1] sm:$0xf]
    %v18 = vld [vmem:[%s1 + $0x4] sm:$0xf]
    %v19 = vld [vmem:[%s1 + $0x8] sm:$0xf]
    %v20 = vld [vmem:[%s1 + $0xc] sm:$0xf]
    %v21 = vld [vmem:[%s2] sm:$0x1]
    %v23 = vperm.slane %v21, 0
    %v29 = vunpack.c.l.b16 %v17
    %v30 = vunpack.c.l.b16 %v18
    %v31 = vunpack.c.l.b16 %v19
    %v32 = vunpack.c.l.b16 %v20
    %v33 = vpack.c.b16 %v30, %v29
    %v34 = vpack.c.b16 %v32, %v31
    %vm37 = vcmask 261120
    %v39 = vsel %vm37, %v16, 0
    %41 = vmatpush.bf16.msra.mxu0 0
    %42 = vmatpush.bf16.msra.mxu0 0
    %43 = vmatpush.bf16.msra.mxu0 0
    %44 = vmatpush.bf16.msra.mxu0 0
    %45 = vmatpush.bf16.msra.mxu0 0
    %46 = vmatpush.bf16.msra.mxu0 0
    %47 = vmatpush.bf16.msra.mxu0 %v34
    %48 = vmatpush.bf16.msra.mxu0 %v33
    %49 = vmatmul.bf16.gmra.mxu0 %v39
    %v50 = vpop.f32.mrf.mxu0
    %v51 = vadd.f32 %v23, %v50
    %v52 = vpop.f32.mrf.mxu0
    %53 = vdwg.mxu0
    %54 = vmax.xlane.f32.xlu0 %v51
    %v55 = vpop.xlane.xlu0 %54
    %v56 = vsub.f32 %v51, %v55
    %v57 = vmul.f32 %v56, 1.442695
    %v58 = vpow.pop %v57
    %59 = vadd.xlane.f32.xlu0 %v58
    %v60 = vpop.xlane.xlu0 %59
    %v61 = vlog2.pop %v60
    %v62 = vmul.f32 %v61, 0.6931472
    %v63 = vsub.f32 %v56, %v62
    %64 = vst [vmem:[#allocation2] sm:$0xff] %v63
    // Predicated region
    $region14: #{logreg_forward.1} parent=1 // pred_check
      _
    $region15: #{logreg_forward.1} parent=1 // pred_check_branch
      %66 = sbr.rel (0) target = $region17
    $region16: #{logreg_forward.1} parent=1 // pred_region
      %68 = vsyncadd [#allocation3], 0
      %s70 = sshll.u32 [#allocation2], 4
      %s71 = int_to_ptr.vmem [resolvable:$true] %s70
      %s72 = sshll.u32 %s3, 4
      %s73 = int_to_ptr.hbm [resolvable:$true] %s72
      %75 = dma.vmem_to_hbm [thread:$0]  %s71, 128, %s73, [#allocation3]
    $region17: #{logreg_forward.1} parent=1 // pred_fallthru
      _
    // Predicated region
    $region18: #{logreg_forward.1} parent=1 // pred_check
      _
    $region19: #{logreg_forward.1} parent=1 // pred_check_branch
      %77 = sbr.rel (0) target = $region21
    $region20: #{logreg_forward.1} parent=1 // pred_region
      %79 = dma.done [#allocation3], 128
    $region21: #{logreg_forward.1} parent=1 // pred_fallthru
      _
    %80 = vsyncpa [#allocation3], 1

</llo_original>
